<compile_context>
chip_gen: v7x
topology: tpu7x:2x2x1
jax: 0.10.0
libtpu: 0.0.40
codegen_flags: <defaults>
</compile_context>

<pallas_src>
import jax
import jax.numpy as jnp
from jax.experimental import pallas as pl
from jax.experimental.pallas import tpu as pltpu
from functools import partial

# Padded tile geometry: one (sublane, lane) = (8, 128) tile covers every case.
M_PAD = 8      # batch rows padded to one sublane group
K_PAD = 8      # in_features (4) zero-padded to 8
N_PAD = 128    # out_features (<= 4) zero-padded to a full lane width


def _dict_dense_kernel(choice_ref, x_ref, w_ref, o_ref):
    # choice_ref (scalar prefetch, SMEM) already drove the weight BlockSpec
    # index_map, so w_ref holds only the selected (K_PAD, N_PAD) slab
    # (leading choice axis squeezed away by pl.Squeezed()).
    del choice_ref
    x = x_ref[...].astype(jnp.float32)      # (M_PAD, K_PAD)
    w = w_ref[...].astype(jnp.float32)      # (K_PAD, N_PAD)
    # Single MXU pass; zero-padded rows/cols contribute nothing.
    o_ref[...] = jnp.dot(x, w, preferred_element_type=jnp.float32).astype(o_ref.dtype)


@partial(jax.jit, static_argnames=("n_out",))
def _dict_dense_forward(choice_idx, x, w_stack, *, n_out):
    """Fused pad -> pallas_call -> slice. One XLA dispatch per call."""
    m, k = x.shape
    out_dtype = jnp.promote_types(x.dtype, w_stack.dtype)
    m_pad = max(M_PAD, ((m + 7) // 8) * 8)

    # Zero-pad x to (m_pad, K_PAD); padded region multiplies into zeros.
    x_pad = jnp.zeros((m_pad, K_PAD), out_dtype).at[:m, :k].set(x.astype(out_dtype))

    itemsize = jnp.dtype(out_dtype).itemsize
    cost = pl.CostEstimate(
        flops=2 * m_pad * K_PAD * N_PAD,
        transcendentals=0,
        bytes_accessed=(m_pad * K_PAD + K_PAD * N_PAD + m_pad * N_PAD) * itemsize,
    )

    out_pad = pl.pallas_call(
        _dict_dense_kernel,
        out_shape=jax.ShapeDtypeStruct((m_pad, N_PAD), out_dtype),
        grid_spec=pltpu.PrefetchScalarGridSpec(
            num_scalar_prefetch=1,
            # The 1-length grid exists only so the scalar-prefetched choice
            # index can feed the data-dependent weight index_map.
            grid=(1,),
            in_specs=[
                pl.BlockSpec((m_pad, K_PAD), lambda i, c: (0, 0)),
                pl.BlockSpec((pl.Squeezed(), K_PAD, N_PAD),
                             lambda i, c: (c[0], 0, 0)),
            ],
            out_specs=pl.BlockSpec((m_pad, N_PAD), lambda i, c: (0, 0)),
        ),
        compiler_params=pltpu.CompilerParams(
            dimension_semantics=("arbitrary",),
        ),
        cost_estimate=cost,
    )(choice_idx, x_pad, w_stack)

    # Slice out the real result inside the same jit (fused with the call).
    return out_pad[:m, :n_out]


class MyDictDense:
    """JAX/Pallas port of the PyTorch MyDictDense module."""

    CHOICES = ("linear1", "linear2", "linear3")

    def __init__(self, key):
        k1, k2, k3 = jax.random.split(key, 3)
        # Deterministic stand-ins for torch.randn(...) parameters.
        self.params = {
            "linear1": jax.random.normal(k1, (4, 4), dtype=jnp.float32),
            "linear2": jax.random.normal(k2, (4, 1), dtype=jnp.float32),
            "linear3": jax.random.normal(k3, (4, 2), dtype=jnp.float32),
        }
        self._out_features = {n: w.shape[1] for n, w in self.params.items()}
        # Precompute the per-choice index arrays once (no per-call transfers).
        self._idx = {
            name: jnp.array([i], dtype=jnp.int32)
            for i, name in enumerate(self.CHOICES)
        }
        # Stack + zero-pad every weight into one (3, K_PAD, N_PAD) slab (once).
        slabs = []
        for name in self.CHOICES:
            w = self.params[name]
            slab = jnp.zeros((K_PAD, N_PAD), jnp.float32)
            slab = slab.at[: w.shape[0], : w.shape[1]].set(w)
            slabs.append(slab)
        self._w_stack = jnp.stack(slabs, axis=0)

    def __call__(self, x, choice="linear1"):
        m, k = x.shape
        assert k == 4, "MyDictDense expects in_features == 4"
        return _dict_dense_forward(
            self._idx[choice], x, self._w_stack,
            n_out=self._out_features[choice],
        )


if __name__ == "__main__":
    key = jax.random.PRNGKey(0)
    module = MyDictDense(key)

    # Matches the reference script's input: x = torch.ones(1, 4)
    x = jnp.ones((1, 4), dtype=jnp.float32)

    out1 = module(x, "linear1")          # (1, 4)
    out2 = module(x, "linear2")          # (1, 1)
    out3 = module(x, "linear3")          # (1, 2)

    # Extra small batch to exercise the same compiled kernel at m=2.
    x2 = jax.random.normal(jax.random.PRNGKey(1), (2, 4), dtype=jnp.float32)
    out4 = module(x2, "linear3")         # (2, 2)

    jax.block_until_ready((out1, out2, out3, out4))

    # Correctness check against plain JAX matmul.
    checks = [
        ("linear1", x, out1),
        ("linear2", x, out2),
        ("linear3", x, out3),
        ("linear3", x2, out4),
    ]
    for choice, xin, out in checks:
        ref = xin @ module.params[choice]
        assert out.shape == ref.shape, f"shape mismatch for {choice}"
        assert out.dtype == ref.dtype, f"dtype mismatch for {choice}"
        assert jnp.allclose(out, ref, atol=1e-5), f"mismatch for {choice}"

    print("KERNEL_OK")
</pallas_src>

<mosaic_0001>
module attributes {stable_mosaic.version = 11 : i64} {
  func.func @_dict_dense_kernel(%arg0: i32, %arg1: memref<1xi32, #tpu.memory_space<smem>>, %arg2: memref<8x8xf32, #tpu.memory_space<vmem>>, %arg3: memref<1x8x128xf32, #tpu.memory_space<vmem>>, %arg4: memref<8x128xf32, #tpu.memory_space<vmem>>) attributes {dimension_semantics = [#tpu.dimension_semantics<arbitrary>], iteration_bounds = array<i64: 1>, scalar_prefetch = 1 : i64, scratch_operands = 0 : i64, tpu.core_type = #tpu.core_type<tc>, window_params = [{pipeline_mode = #tpu.pipeline_mode<synchronous>, transform_indices = @transform_0, window_bounds = array<i64: 8, 8>}, {transform_indices = @transform_1, window_bounds = array<i64: 1, 8, 128>}, {pipeline_mode = #tpu.pipeline_mode<synchronous>, transform_indices = @transform_2, window_bounds = array<i64: 8, 128>}]} {
    %c0 = arith.constant 0 : index
    %c0_0 = arith.constant 0 : index
    %0 = vector.load %arg2[%c0, %c0_0] : memref<8x8xf32, #tpu.memory_space<vmem>>, vector<8x8xf32>
    %c0_1 = arith.constant 0 : index
    %c0_2 = arith.constant 0 : index
    %c0_3 = arith.constant 0 : index
    %1 = vector.load %arg3[%c0_1, %c0_2, %c0_3] : memref<1x8x128xf32, #tpu.memory_space<vmem>>, vector<1x8x128xf32>
    %2 = vector.shape_cast %1 : vector<1x8x128xf32> to vector<8x128xf32>
    %cst = arith.constant dense<0.000000e+00> : vector<8x128xf32>
    %3 = tpu.matmul %0, %2, %cst {dimension_numbers = #tpu.dot_dimension_numbers<[1], [0], [0], [1], [0, 0, 1, 1], [], []>} : vector<8x8xf32>, vector<8x128xf32>, vector<8x128xf32> -> vector<8x128xf32>
    %c0_4 = arith.constant 0 : index
    %c0_5 = arith.constant 0 : index
    %4 = vector.load %arg4[%c0_4, %c0_5] : memref<8x128xf32, #tpu.memory_space<vmem>>, vector<8x128xf32>
    tpu.vector_store %arg4[%c0_4, %c0_5], %3 {strides = array<i32>} : memref<8x128xf32, #tpu.memory_space<vmem>>, vector<8x128xf32>,
    return
  }
  func.func @transform_0(%arg0: i32, %arg1: memref<1xi32, #tpu.memory_space<smem>>) -> (i32, i32) {
    %c0_i32 = arith.constant 0 : i32
    %c0_i32_0 = arith.constant 0 : i32
    %c0_i32_1 = arith.constant 0 : i32
    return %c0_i32, %c0_i32_0 : i32, i32
  }
  func.func @transform_1(%arg0: i32, %arg1: memref<1xi32, #tpu.memory_space<smem>>) -> (i32, i32, i32) {
    %c0 = arith.constant 0 : index
    %0 = memref.load %arg1[%c0] : memref<1xi32, #tpu.memory_space<smem>>
    %c0_i32 = arith.constant 0 : i32
    %c0_i32_0 = arith.constant 0 : i32
    %c0_i32_1 = arith.constant 0 : i32
    return %0, %c0_i32, %c0_i32_0 : i32, i32, i32
  }
  func.func @transform_2(%arg0: i32, %arg1: memref<1xi32, #tpu.memory_space<smem>>) -> (i32, i32) {
    %c0_i32 = arith.constant 0 : i32
    %c0_i32_0 = arith.constant 0 : i32
    %c0_i32_1 = arith.constant 0 : i32
    return %c0_i32, %c0_i32_0 : i32, i32
  }
}

</mosaic_0001>

<llo_original>
// kernel: _dict_dense_forward.1
$region0: #{_dict_dense_forward.1}
  #allocation0 [shape = 'u32[]', space=smem, size = 0x4, offset = 0x4, fixed_abs, tag = 'smem constant byte address 0x4 - core index']
  #allocation1 [shape = 'u32[144,128]{1,0:T(1,128)}', space=vmem, size = 0x12000, scoped, tag = 'internal scratch']
  #allocation2 [shape = 's32[1]{0}', space=sflag, size = 0x4, scoped, tag = 'scoped memory for _dict_dense_forward.1']
  #allocation3 [shape = 's32[1]{0:T(128)S(6)}', space=smem, size = 0x200, scoped, tag = 'prefetched SMEM operand 0']
  %s0 = inlined_call_operand.<no memory space> [shape: s32[1], index: 0, kind: input, shape index: {}]
  %s1 = inlined_call_operand.vmem [shape: f32[8,8], index: 1, kind: input, shape index: {}]
  %s2 = inlined_call_operand.hbm [shape: f32[3,8,128], index: 2, kind: input, shape index: {}]
  %s3 = inlined_call_operand.vmem [shape: f32[8,128], index: 3, kind: output, shape index: {}]
  %s4 = sld [smem:[#allocation0]]
  $region22: #{_dict_dense_forward.1} parent=0
    _
  %s6 = ssub.s32 1, %s4
  %s7 = scalar_select 0, %s6, %s4
  %8 = sst [smem:[#allocation3]] %s0
  $region1: #{_dict_dense_forward.1} parent=0
    #allocation4 [shape = 'u8[4096]{0}', space=vmem, size = 0x1000, scoped, tag = 'input window, operand 2, single buffered']
    #allocation5 [shape = 's32[1]{0}', space=sflag, size = 0x4, scoped, tag = 'scoped memory for _dict_dense_forward.1']
    %9 = vsyncpa [#allocation5], 0
    // Predicated region
    $region2: #{_dict_dense_forward.1} parent=1 // pred_check
      _
    $region3: #{_dict_dense_forward.1} parent=1 // pred_check_branch
      %11 = sbr.rel (0) target = $region5
    $region4: #{_dict_dense_forward.1} parent=1 // pred_region
      _
    $region5: #{_dict_dense_forward.1} parent=1 // pred_fallthru
      _
    // Predicated region
    $region6: #{_dict_dense_forward.1} parent=1 // pred_check
      _
    $region7: #{_dict_dense_forward.1} parent=1 // pred_check_branch
      %13 = sbr.rel (0) target = $region9
    $region8: #{_dict_dense_forward.1} parent=1 // pred_region
      %s14 = sld [smem:[#allocation3]]
      %s16 = ssub.s32 128, 128
      %17 = vsyncadd [#allocation5], %s16
      %s18 = smul.addr %s14, 128
      %s19 = scalar_lea.hbm %s2, %s18
      %s21 = sshll.u32 [#allocation4], 4
      %s22 = int_to_ptr.vmem [resolvable:$true] %s21
      %24 = dma.hbm_to_vmem [thread:$0]  %s19, 128, %s22, [#allocation5]
    $region9: #{_dict_dense_forward.1} parent=1 // pred_fallthru
      _
    // Predicated region
    $region10: #{_dict_dense_forward.1} parent=1 // pred_check
      _
    $region11: #{_dict_dense_forward.1} parent=1 // pred_check_branch
      %26 = sbr.rel (0) target = $region13
    $region12: #{_dict_dense_forward.1} parent=1 // pred_region
      %27 = dma.done [#allocation5], 128
    $region13: #{_dict_dense_forward.1} parent=1 // pred_fallthru
      _
    %s28 = sld [smem:[#allocation3]]
    %v29 = vld [vmem:[%s1] sm:$0xff]
    %v30 = vld [vmem:[#allocation4] sm:$0xff]
    %vm31 = vcmask 64512
    %v33 = vsel %vm31, %v29, 0
    %35 = vmatprep.subr.mxu0 0.0
    %36 = vmatpush1.msra.mxu0 %v30
    %37 = vmatprep.subr.mxu0 0.0
    %38 = vmatpush1.msra.mxu0 0.0
    %39 = vmatprep.subr.mxu0 0.0
    %40 = vmatpush1.msra.mxu0 0.0
    %41 = vmatprep.subr.mxu0 0.0
    %42 = vmatpush1.msra.mxu0 0.0
    %43 = vmatprep.subr.mxu0 0.0
    %44 = vmatpush1.msra.mxu0 0.0
    %45 = vmatprep.subr.mxu0 0.0
    %46 = vmatpush1.msra.mxu0 0.0
    %47 = vmatprep.subr.mxu0 0.0
    %48 = vmatpush1.msra.mxu0 0.0
    %49 = vmatprep.subr.mxu0 0.0
    %50 = vmatpush1.msra.mxu0 0.0
    %51 = vmatprep.subr.mxu0 0.0
    %52 = vmatpush1.msra.mxu0 0.0
    %53 = vmatprep.subr.mxu0 0.0
    %54 = vmatpush1.msra.mxu0 0.0
    %55 = vmatprep.subr.mxu0 0.0
    %56 = vmatpush1.msra.mxu0 0.0
    %57 = vmatprep.subr.mxu0 0.0
    %58 = vmatpush1.msra.mxu0 0.0
    %59 = vmatprep.subr.mxu0 0.0
    %60 = vmatpush1.msra.mxu0 0.0
    %61 = vmatprep.subr.mxu0 0.0
    %62 = vmatpush1.msra.mxu0 0.0
    %63 = vmatprep.subr.mxu0 0.0
    %64 = vmatpush1.msra.mxu0 0.0
    %65 = vmatprep.subr.mxu0 0.0
    %66 = vmatpush1.msra.mxu0 0.0
    %67 = vmatprep.subr.mxu0 0.0
    %68 = vmatpush1.msra.mxu0 0.0
    %69 = vmatprep.subr.mxu0 0.0
    %70 = vmatpush1.msra.mxu0 0.0
    %71 = vmatprep.subr.mxu0 0.0
    %72 = vmatpush1.msra.mxu0 0.0
    %73 = vmatprep.subr.mxu0 0.0
    %74 = vmatpush1.msra.mxu0 0.0
    %75 = vmatprep.subr.mxu0 0.0
    %76 = vmatpush1.msra.mxu0 0.0
    %77 = vmatprep.subr.mxu0 0.0
    %78 = vmatpush1.msra.mxu0 0.0
    %79 = vmatprep.subr.mxu0 0.0
    %80 = vmatpush1.msra.mxu0 0.0
    %81 = vmatprep.subr.mxu0 0.0
    %82 = vmatpush1.msra.mxu0 0.0
    %83 = vmatprep.subr.mxu0 0.0
    %84 = vmatpush1.msra.mxu0 0.0
    %85 = vmatprep.subr.mxu0 0.0
    %86 = vmatpush1.msra.mxu0 0.0
    %87 = vmatprep.subr.mxu0 0.0
    %88 = vmatpush1.msra.mxu0 0.0
    %89 = vmatprep.subr.mxu0 0.0
    %90 = vmatpush1.msra.mxu0 0.0
    %91 = vmatprep.subr.mxu0 0.0
    %92 = vmatpush1.msra.mxu0 0.0
    %93 = vmatprep.subr.mxu0 0.0
    %94 = vmatpush1.msra.mxu0 0.0
    %95 = vmatprep.subr.mxu0 0.0
    %96 = vmatpush1.msra.mxu0 0.0
    %97 = vmatprep.subr.mxu0 0.0
    %98 = vmatpush1.msra.mxu0 0.0
    %99 = vmatprep.mubr.f32.mxu0 0.0
    %100 = vmatmul.mubr.f32.gmra.mrb[0].mxu0 %v33
    %v101 = vpop.f32.mrb[0].mxu0
    %v102 = vadd.f32 0.0, %v101
    %v103 = vpop.f32.mrb[0].mxu0
    %104 = vdwg.mxu0
    %105 = vst [vmem:[%s3] sm:$0xff] %v102
    // Predicated region
    $region14: #{_dict_dense_forward.1} parent=1 // pred_check
      _
    $region15: #{_dict_dense_forward.1} parent=1 // pred_check_branch
      %107 = sbr.rel (0) target = $region17
    $region16: #{_dict_dense_forward.1} parent=1 // pred_region
      _
    $region17: #{_dict_dense_forward.1} parent=1 // pred_fallthru
      _
    // Predicated region
    $region18: #{_dict_dense_forward.1} parent=1 // pred_check
      _
    $region19: #{_dict_dense_forward.1} parent=1 // pred_check_branch
      %109 = sbr.rel (0) target = $region21
    $region20: #{_dict_dense_forward.1} parent=1 // pred_region
      _
    $region21: #{_dict_dense_forward.1} parent=1 // pred_fallthru
      _
    %110 = vsyncpa [#allocation5], 1

</llo_original>
